<compile_context>
chip_gen: v5e
topology: v5e:2x2
jax: 0.10.0
libtpu: 0.0.40
codegen_flags: <defaults>
</compile_context>

<pallas_src>
import jax
import jax.numpy as jnp
from jax.experimental import pallas as pl
from jax.experimental.pallas import tpu as pltpu


# <= 64 MiB physical VMEM on v7x (leaves headroom); generous on v5e/v6e (128 MiB).
_VMEM_LIMIT_BYTES = 48 * 1024 * 1024


def _cdiv(a, b):
    return -(-a // b)


# ---------------------------------------------------------------------------
# Single-phase kernel: one (TB, C, HW) block per grid step (batch tiled, cdiv).
# ---------------------------------------------------------------------------
def _se_kernel(x_ref, w1_ref, w2_ref, o_ref):
    # x_ref : (TB, C, HW)  NCHW-native block (C on sublanes, HW on lanes)
    # w1_ref: (C,  C_r)    fc1 weight, pre-transposed, f32
    # w2_ref: (C_r, C)     fc2 weight, pre-transposed, f32
    xf = x_ref[...].astype(jnp.float32)          # no-op for f32 inputs
    inv_hw = 1.0 / xf.shape[2]

    # Squeeze: global average pool over the spatial (lane) axis.  Cross-lane
    # reduce uses the XLU, which is otherwise idle in this HBM-bound kernel.
    y = jnp.sum(xf, axis=2) * inv_hw                                  # (TB, C)

    # Excitation: Linear -> ReLU -> Linear -> Sigmoid (tiny; latency only).
    h = jnp.maximum(
        jnp.dot(y, w1_ref[...], preferred_element_type=jnp.float32), 0.0)
    s = jax.nn.sigmoid(
        jnp.dot(h, w2_ref[...], preferred_element_type=jnp.float32))  # (TB, C)

    # Scale in f32, cast only on the store; the per-channel gate broadcasts
    # along the lane (HW) axis so the dominant store path stays lane-dense.
    o_ref[...] = (xf * s[:, :, None]).astype(o_ref.dtype)


def _pick_batch_tile(b, bytes_per_batch, *, target_bytes=4 << 20,
                     min_block_bytes=512 << 10, min_grid_steps=2,
                     ideal_grid_steps=8):
    """Batch-tile size: blocks near target_bytes (amortize ~0.35us/step fixed
    overhead), but never fewer than min_grid_steps grid steps when B allows it
    (both v7x TensorCores get work and the DMAs double-buffer), and more steps
    while blocks stay above min_block_bytes.  The grid uses cdiv, so the tile
    does not need to divide B (tail block padded; padded rows are dropped)."""
    bytes_per_batch = max(1, int(bytes_per_batch))
    steps = max(_cdiv(b, max(1, target_bytes // bytes_per_batch)),
                min(b, min_grid_steps))
    while steps < min(b, ideal_grid_steps):
        if _cdiv(b, steps + 1) * bytes_per_batch < min_block_bytes:
            break
        steps += 1
    return _cdiv(b, steps)


def _se_single_phase(x3, w1t, w2t, *, donate_x=False):
    b, c, hw = x3.shape
    c_r = w1t.shape[1]
    bytes_per_batch = c * hw * jnp.dtype(x3.dtype).itemsize
    tb = _pick_batch_tile(b, bytes_per_batch)
    grid = (_cdiv(b, tb),)

    return pl.pallas_call(
        _se_kernel,
        out_shape=jax.ShapeDtypeStruct((b, c, hw), x3.dtype),
        grid_spec=pltpu.PrefetchScalarGridSpec(
            num_scalar_prefetch=0,
            grid=grid,
            in_specs=[
                pl.BlockSpec((tb, c, hw), lambda i: (i, 0, 0)),
                pl.BlockSpec((c, c_r), lambda i: (0, 0)),
                pl.BlockSpec((c_r, c), lambda i: (0, 0)),
            ],
            out_specs=pl.BlockSpec((tb, c, hw), lambda i: (i, 0, 0)),
        ),
        compiler_params=pltpu.CompilerParams(
            dimension_semantics=("parallel",),
            vmem_limit_bytes=_VMEM_LIMIT_BYTES,
        ),
        input_output_aliases={0: 0} if donate_x else {},
    )(x3, w1t, w2t)


# ---------------------------------------------------------------------------
# Two-phase fallback: (C, HW) slab too large for a single VMEM block.
# ---------------------------------------------------------------------------
def _pick_hw_tile(hw, max_elems):
    """Largest divisor of hw that is a multiple of 128 (lane-dense, satisfies
    the (8,128) block rule) and at most max_elems; falls back to the full hw
    extent (always legal) when no such divisor exists."""
    d = (min(int(max_elems), hw) // 128) * 128
    while d >= 128:
        if hw % d == 0:
            return d
        d -= 128
    # TODO(synk): hw with no multiple-of-128 divisor (e.g. 56*56) falls back to
    # full-HW blocks; add in-kernel lane masking if such shapes need HW tiling.
    return hw


def _se_pool_kernel(x_ref, y_ref):
    # x_ref: (1, C, THW) tile; y_ref: (1, C, 1) f32, resident across the HW axis.
    @pl.when(pl.program_id(1) == 0)
    def _():
        y_ref[...] = jnp.zeros_like(y_ref)

    y_ref[...] += jnp.sum(x_ref[...].astype(jnp.float32), axis=2, keepdims=True)


def _se_scale_kernel(s_ref, x_ref, o_ref):
    # s_ref: (1, C, 1) f32 gate; x_ref / o_ref: (1, C, THW).
    o_ref[...] = (x_ref[...].astype(jnp.float32) * s_ref[...]).astype(o_ref.dtype)


def _se_two_phase(x3, w1t, w2t, *, fallback_block_bytes=2 << 20, donate_x=False):
    """Streams x twice: pass 1 accumulates per-(b, c) sums over HW tiles, the
    tiny excitation runs in plain JAX, pass 2 applies the gate.  Needed when a
    full (C, HW) slab does not fit a small VMEM block (v7x: 64 MiB VMEM)."""
    b, c, hw = x3.shape
    itemsize = jnp.dtype(x3.dtype).itemsize
    thw = _pick_hw_tile(hw, max(1, fallback_block_bytes // max(1, c * itemsize)))
    n_hw = hw // thw
    grid = (b, n_hw)

    pooled = pl.pallas_call(
        _se_pool_kernel,
        out_shape=jax.ShapeDtypeStruct((b, c, 1), jnp.float32),
        grid_spec=pltpu.PrefetchScalarGridSpec(
            num_scalar_prefetch=0,
            grid=grid,
            in_specs=[pl.BlockSpec((1, c, thw), lambda i, j: (i, 0, j))],
            out_specs=pl.BlockSpec((1, c, 1), lambda i, j: (i, 0, 0)),
        ),
        compiler_params=pltpu.CompilerParams(
            dimension_semantics=("parallel", "arbitrary"),
            vmem_limit_bytes=_VMEM_LIMIT_BYTES,
        ),
    )(x3)

    # Excitation on the tiny (B, C) pooled vector: plain JAX (a few KFLOPs).
    y = pooled[:, :, 0] * (1.0 / hw)
    h = jnp.maximum(jnp.dot(y, w1t, preferred_element_type=jnp.float32), 0.0)
    s = jax.nn.sigmoid(jnp.dot(h, w2t, preferred_element_type=jnp.float32))
    s3 = s[:, :, None]                                           # (B, C, 1) f32

    return pl.pallas_call(
        _se_scale_kernel,
        out_shape=jax.ShapeDtypeStruct((b, c, hw), x3.dtype),
        grid_spec=pltpu.PrefetchScalarGridSpec(
            num_scalar_prefetch=0,
            grid=grid,
            in_specs=[
                pl.BlockSpec((1, c, 1), lambda i, j: (i, 0, 0)),
                pl.BlockSpec((1, c, thw), lambda i, j: (i, 0, j)),
            ],
            out_specs=pl.BlockSpec((1, c, thw), lambda i, j: (i, 0, j)),
        ),
        compiler_params=pltpu.CompilerParams(
            dimension_semantics=("parallel", "parallel"),
            vmem_limit_bytes=_VMEM_LIMIT_BYTES,
        ),
        input_output_aliases={1: 0} if donate_x else {},
    )(s3, x3)


# ---------------------------------------------------------------------------
# Public wrappers.
# ---------------------------------------------------------------------------
def se_layer_flat(x3, w1, w2, *, single_phase_max_bytes=4 << 20,
                  fallback_block_bytes=2 << 20, donate_x=False):
    """SE layer on a flattened NCHW activation x3: (B, C, HW).
    w1: (C//r, C), w2: (C, C//r) — PyTorch nn.Linear(bias=False) layout."""
    b, c, hw = x3.shape
    # Pre-transpose + pre-cast the tiny weights once (kernel does plain y @ W,
    # i.e. y @ weight.T, with f32 MXU accumulation).  Their BlockSpec index is
    # constant, so they are DMA'd into VMEM only once for the whole grid.
    w1t = jnp.asarray(w1, jnp.float32).T            # (C,   C_r)
    w2t = jnp.asarray(w2, jnp.float32).T            # (C_r, C)

    bytes_per_batch = c * hw * jnp.dtype(x3.dtype).itemsize
    if bytes_per_batch <= single_phase_max_bytes:
        return _se_single_phase(x3, w1t, w2t, donate_x=donate_x)
    return _se_two_phase(x3, w1t, w2t,
                         fallback_block_bytes=fallback_block_bytes,
                         donate_x=donate_x)


def se_layer(x, w1, w2, **kwargs):
    """NCHW SELayer forward matching the PyTorch module.  x: (B, C, H, W).
    Only a free (metadata-only) reshape happens outside the kernels — no extra
    HBM passes (the previous NCHW<->channels-last transposes are gone)."""
    b, c, h, w = x.shape
    out3 = se_layer_flat(x.reshape(b, c, h * w), w1, w2, **kwargs)
    return out3.reshape(b, c, h, w)


# ---------------------------------------------------------------------------
# Self-test.
# ---------------------------------------------------------------------------
if __name__ == "__main__":
    def reference(x, w1, w2):
        xf = x.astype(jnp.float32)
        y = jnp.mean(xf, axis=(2, 3))
        h = jnp.maximum(y @ w1.astype(jnp.float32).T, 0.0)
        s = jax.nn.sigmoid(h @ w2.astype(jnp.float32).T)
        return xf * s[:, :, None, None]

    key = jax.random.PRNGKey(0)

    cases = [
        # Multi-step grid (tb=2, 2 parallel steps), C < 128, f32.
        dict(name="f32_multi_step", b=4, c=64, h=16, w=16, red=16,
             dtype=jnp.float32, kwargs={}),
        # bf16 activations, odd batch -> cdiv grid with a padded tail block.
        dict(name="bf16_padded_tail", b=3, c=128, h=8, w=8, red=16,
             dtype=jnp.bfloat16, kwargs={}),
        # Forced two-phase fallback (HW tiled into 2 blocks, pool accumulation).
        dict(name="f32_two_phase", b=2, c=32, h=16, w=16, red=4,
             dtype=jnp.float32,
             kwargs=dict(single_phase_max_bytes=0,
                         fallback_block_bytes=16 * 1024)),
    ]

    for case in cases:
        key, kx, k1, k2 = jax.random.split(key, 4)
        b, c, h, w, red = case["b"], case["c"], case["h"], case["w"], case["red"]
        c_r = c // red
        x = jax.random.normal(kx, (b, c, h, w), dtype=jnp.float32)
        x = x.astype(case["dtype"])
        w1 = jax.random.normal(k1, (c_r, c), dtype=jnp.float32) * 0.1   # fc1.weight
        w2 = jax.random.normal(k2, (c, c_r), dtype=jnp.float32) * 0.1   # fc2.weight

        out = se_layer(x, w1, w2, **case["kwargs"])
        jax.block_until_ready(out)

        ref = reference(x, w1, w2)
        tol = 5e-2 if case["dtype"] == jnp.bfloat16 else 1e-4
        err = float(jnp.max(jnp.abs(out.astype(jnp.float32) - ref)))
        assert err <= tol, (case["name"], err)

    print("KERNEL_OK")
</pallas_src>

<mosaic_0001>
module attributes {stable_mosaic.version = 11 : i64} {
  func.func @_se_kernel(%arg0: i32, %arg1: memref<2x64x256xf32, #tpu.memory_space<vmem>>, %arg2: memref<64x4xf32, #tpu.memory_space<vmem>>, %arg3: memref<4x64xf32, #tpu.memory_space<vmem>>, %arg4: memref<2x64x256xf32, #tpu.memory_space<vmem>>) attributes {dimension_semantics = [#tpu.dimension_semantics<parallel>], iteration_bounds = array<i64: 2>, scalar_prefetch = 0 : i64, scratch_operands = 0 : i64, tpu.core_type = #tpu.core_type<tc>, window_params = [{transform_indices = @transform_0, window_bounds = array<i64: 2, 64, 256>}, {pipeline_mode = #tpu.pipeline_mode<synchronous>, transform_indices = @transform_1, window_bounds = array<i64: 64, 4>}, {pipeline_mode = #tpu.pipeline_mode<synchronous>, transform_indices = @transform_2, window_bounds = array<i64: 4, 64>}, {transform_indices = @transform_3, window_bounds = array<i64: 2, 64, 256>}]} {
    %c0 = arith.constant 0 : index
    %c0_0 = arith.constant 0 : index
    %c0_1 = arith.constant 0 : index
    %0 = vector.load %arg1[%c0, %c0_0, %c0_1] : memref<2x64x256xf32, #tpu.memory_space<vmem>>, vector<2x64x256xf32>
    %cst = arith.constant dense<0.000000e+00> : vector<2x64xf32>
    %1 = vector.multi_reduction <add>, %0, %cst [2] : vector<2x64x256xf32> to vector<2x64xf32>
    %cst_2 = arith.constant 3.906250e-03 : f32
    %2 = vector.broadcast %cst_2 : f32 to vector<2x64xf32>
    %3 = arith.mulf %1, %2 : vector<2x64xf32>
    %c0_3 = arith.constant 0 : index
    %c0_4 = arith.constant 0 : index
    %4 = vector.load %arg2[%c0_3, %c0_4] : memref<64x4xf32, #tpu.memory_space<vmem>>, vector<64x4xf32>
    %cst_5 = arith.constant dense<0.000000e+00> : vector<2x4xf32>
    %5 = tpu.matmul %3, %4, %cst_5 {dimension_numbers = #tpu.dot_dimension_numbers<[1], [0], [0], [1], [0, 0, 1, 1], [], []>} : vector<2x64xf32>, vector<64x4xf32>, vector<2x4xf32> -> vector<2x4xf32>
    %cst_6 = arith.constant 0.000000e+00 : f32
    %6 = vector.broadcast %cst_6 : f32 to vector<2x4xf32>
    %7 = arith.maximumf %5, %6 : vector<2x4xf32>
    %c0_7 = arith.constant 0 : index
    %c0_8 = arith.constant 0 : index
    %8 = vector.load %arg3[%c0_7, %c0_8] : memref<4x64xf32, #tpu.memory_space<vmem>>, vector<4x64xf32>
    %cst_9 = arith.constant dense<0.000000e+00> : vector<2x64xf32>
    %9 = tpu.matmul %7, %8, %cst_9 {dimension_numbers = #tpu.dot_dimension_numbers<[1], [0], [0], [1], [0, 0, 1, 1], [], []>} : vector<2x4xf32>, vector<4x64xf32>, vector<2x64xf32> -> vector<2x64xf32>
    %10 = arith.negf %9 : vector<2x64xf32>
    %11 = math.exp %10 : vector<2x64xf32>
    %cst_10 = arith.constant 1.000000e+00 : f32
    %12 = vector.broadcast %cst_10 : f32 to vector<2x64xf32>
    %13 = arith.addf %12, %11 : vector<2x64xf32>
    %14 = arith.divf %12, %13 : vector<2x64xf32>
    %15 = vector.shape_cast %14 : vector<2x64xf32> to vector<2x64x1xf32>
    %16 = vector.broadcast %15 : vector<2x64x1xf32> to vector<2x64x256xf32>
    %17 = arith.mulf %0, %16 : vector<2x64x256xf32>
    %c0_11 = arith.constant 0 : index
    %c0_12 = arith.constant 0 : index
    %c0_13 = arith.constant 0 : index
    %18 = vector.load %arg4[%c0_11, %c0_12, %c0_13] : memref<2x64x256xf32, #tpu.memory_space<vmem>>, vector<2x64x256xf32>
    tpu.vector_store %arg4[%c0_11, %c0_12, %c0_13], %17 {strides = array<i32>} : memref<2x64x256xf32, #tpu.memory_space<vmem>>, vector<2x64x256xf32>,
    return
  }
  func.func @transform_0(%arg0: i32) -> (i32, i32, i32) {
    %c0_i32 = arith.constant 0 : i32
    %c0_i32_0 = arith.constant 0 : i32
    %c0_i32_1 = arith.constant 0 : i32
    return %arg0, %c0_i32, %c0_i32_0 : i32, i32, i32
  }
  func.func @transform_1(%arg0: i32) -> (i32, i32) {
    %c0_i32 = arith.constant 0 : i32
    %c0_i32_0 = arith.constant 0 : i32
    %c0_i32_1 = arith.constant 0 : i32
    return %c0_i32, %c0_i32_0 : i32, i32
  }
  func.func @transform_2(%arg0: i32) -> (i32, i32) {
    %c0_i32 = arith.constant 0 : i32
    %c0_i32_0 = arith.constant 0 : i32
    %c0_i32_1 = arith.constant 0 : i32
    return %c0_i32, %c0_i32_0 : i32, i32
  }
  func.func @transform_3(%arg0: i32) -> (i32, i32, i32) {
    %c0_i32 = arith.constant 0 : i32
    %c0_i32_0 = arith.constant 0 : i32
    %c0_i32_1 = arith.constant 0 : i32
    return %arg0, %c0_i32, %c0_i32_0 : i32, i32, i32
  }
}

</mosaic_0001>

<llo_original>
// kernel: tpu_custom_call.1
$region0: #{tpu_custom_call.1}
  #allocation0 [shape = 'u32[]', space=smem, size = 0x4, offset = 0x4, fixed_abs, tag = 'smem constant byte address 0x4 - core index']
  #allocation1 [shape = 'u32[72,128]{1,0:T(1,128)}', space=vmem, size = 0x9000, scoped, tag = 'internal scratch']
  %s0 = inlined_call_operand.hbm [shape: f32[4,64,256], index: 0, kind: input, shape index: {}]
  %s1 = inlined_call_operand.vmem [shape: f32[64,4], index: 1, kind: input, shape index: {}]
  %s2 = inlined_call_operand.vmem [shape: f32[4,64], index: 2, kind: input, shape index: {}]
  %s3 = inlined_call_operand.hbm [shape: f32[4,64,256], index: 3, kind: output, shape index: {}]
  %s4 = sld [smem:[#allocation0]]
  $region49: #{tpu_custom_call.1} parent=0
    _
  %s6 = ssub.s32 1, %s4
  %s7 = scalar_select 0, %s6, %s4
  $region1: #{tpu_custom_call.1} parent=0
    #allocation2 [shape = 'u8[262144]{0}', space=vmem, size = 0x40000, scoped, tag = 'input window, operand 0']
    #allocation3 [shape = 's32[2]{0}', space=sflag, size = 0x8, scoped, tag = 'scoped memory for tpu_custom_call.1']
    #allocation4 [shape = 's32[2]{0}', space=sflag, size = 0x8, scoped, tag = 'scoped memory for tpu_custom_call.1']
    #allocation5 [shape = 'u8[262144]{0}', space=vmem, size = 0x40000, scoped, tag = 'output window, operand 0']
    %8 = vsyncpa [#allocation3], 0
    %s9 = scalar_lea.sflag [#allocation3], 1
    %10 = vsyncpa %s9, 0
    %11 = vsyncpa [#allocation4], 0
    %s12 = scalar_lea.sflag [#allocation4], 1
    %13 = vsyncpa %s12, 0
    loop: start=0, step=1, limit=4
    $region2: #{tpu_custom_call.1} parent=1 // loop_pre_header
      _
    $region3: #{tpu_custom_call.1} parent=1 // loop_header
      %s15 = sphi 0, %s19
      %p16 = scmp.ge.s32.totalorder %s15, 4
      %s25 = sphi 0, %s27
      %s28 = sphi 0, %s25
      %s29 = sphi 0, %s28
      %s45 = sphi 0, %s29
      %s49 = sphi 0, %s49
      %s51 = sphi 0, %s49
      %s52 = sphi 0, %s51
      %s66 = sphi 0, %s52
      %s70 = sphi 0, %s70
      %s72 = sphi 0, %s70
      %s73 = sphi 0, %s72
      %s87 = sphi 0, %s73
      %s93 = sphi 0, %s95
      %s96 = sphi 0, %s93
      %s97 = sphi 0, %s96
      %s113 = sphi 0, %s97
    $region4: #{tpu_custom_call.1} parent=1 // loop_header_branch
      %18 = sbr.rel (%p16) target = $region8
    $region5: #{tpu_custom_call.1} parent=1 // loop_body
      %s20 = ssub.s32 %s15, 1
      %s21 = ssub.s32 %s15, 2
      %s22 = sadd.s32 %s15, 1
      %s23 = ssub.s32 %s15, %s22
      %p24 = scmp.eq.s32.totalorder %s23, 0
      %s26 = sadd.s32 %s25, 1
      %s27 = scalar_select %p24, %s25, %s26
      %p30 = pneg %p24
      %p31 = scmp.eq.s32.totalorder %s15, 1
      %p32 = por %p30, %p31
      %p33 = scmp.ne.s32.totalorder %s25, %s28
      %p34 = scmp.eq.s32.totalorder %s15, 0
      %p35 = por %p33, %p34
      %p36 = scmp.ne.s32.totalorder %s25, %s28
      %p37 = scmp.eq.s32.totalorder %s20, 1
      %p38 = por %p36, %p37
      %p39 = scmp.ne.s32.totalorder %s28, %s29
      %p40 = scmp.eq.s32.totalorder %s20, 0
      %p41 = por %p39, %p40
      %p42 = scmp.ne.s32.totalorder %s28, %s29
      %p43 = scmp.eq.s32.totalorder %s21, 1
      %p44 = por %p42, %p43
      %p46 = scmp.ne.s32.totalorder %s29, %s45
      %p47 = scmp.eq.s32.totalorder %s21, 0
      %p48 = por %p46, %p47
      %s50 = sadd.s32 %s49, 1
      %p53 = scmp.eq.s32.totalorder %s15, 1
      %p54 = scmp.ne.s32.totalorder %s49, %s51
      %p55 = scmp.eq.s32.totalorder %s15, 0
      %p56 = por %p54, %p55
      %p57 = scmp.ne.s32.totalorder %s49, %s51
      %p58 = scmp.eq.s32.totalorder %s20, 1
      %p59 = por %p57, %p58
      %p60 = scmp.ne.s32.totalorder %s51, %s52
      %p61 = scmp.eq.s32.totalorder %s20, 0
      %p62 = por %p60, %p61
      %p63 = scmp.ne.s32.totalorder %s51, %s52
      %p64 = scmp.eq.s32.totalorder %s21, 1
      %p65 = por %p63, %p64
      %p67 = scmp.ne.s32.totalorder %s52, %s66
      %p68 = scmp.eq.s32.totalorder %s21, 0
      %p69 = por %p67, %p68
      %s71 = sadd.s32 %s70, 1
      %p74 = scmp.eq.s32.totalorder %s15, 1
      %p75 = scmp.ne.s32.totalorder %s70, %s72
      %p76 = scmp.eq.s32.totalorder %s15, 0
      %p77 = por %p75, %p76
      %p78 = scmp.ne.s32.totalorder %s70, %s72
      %p79 = scmp.eq.s32.totalorder %s20, 1
      %p80 = por %p78, %p79
      %p81 = scmp.ne.s32.totalorder %s72, %s73
      %p82 = scmp.eq.s32.totalorder %s20, 0
      %p83 = por %p81, %p82
      %p84 = scmp.ne.s32.totalorder %s72, %s73
      %p85 = scmp.eq.s32.totalorder %s21, 1
      %p86 = por %p84, %p85
      %p88 = scmp.ne.s32.totalorder %s73, %s87
      %p89 = scmp.eq.s32.totalorder %s21, 0
      %p90 = por %p88, %p89
      %s91 = ssub.s32 %s15, %s22
      %p92 = scmp.eq.s32.totalorder %s91, 0
      %s94 = sadd.s32 %s93, 1
      %s95 = scalar_select %p92, %s93, %s94
      %p98 = pneg %p92
      %p99 = scmp.eq.s32.totalorder %s15, 1
      %p100 = por %p98, %p99
      %p101 = scmp.ne.s32.totalorder %s93, %s96
      %p102 = scmp.eq.s32.totalorder %s15, 0
      %p103 = por %p101, %p102
      %p104 = scmp.ne.s32.totalorder %s93, %s96
      %p105 = scmp.eq.s32.totalorder %s20, 1
      %p106 = por %p104, %p105
      %p107 = scmp.ne.s32.totalorder %s96, %s97
      %p108 = scmp.eq.s32.totalorder %s20, 0
      %p109 = por %p107, %p108
      %p110 = scmp.ne.s32.totalorder %s96, %s97
      %p111 = scmp.eq.s32.totalorder %s21, 1
      %p112 = por %p110, %p111
      %p114 = scmp.ne.s32.totalorder %s97, %s113
      %p115 = scmp.eq.s32.totalorder %s21, 0
      %p116 = por %p114, %p115
      %p117 = scmp.le.s32.totalorder 1, %s15
      %p118 = scmp.lt.s32.totalorder %s15, 3
      %p119 = pnand %p117, %p118
      %p120 = pneg %p119
      // Predicated region
      $region9: #{tpu_custom_call.1} parent=5 // pred_check
        _
      $region10: #{tpu_custom_call.1} parent=5 // pred_check_branch
        %122 = sbr.rel (%p119) target = $region12
      $region11: #{tpu_custom_call.1} parent=5 // pred_region
        %s123 = ssub.s32 %s15, 1
        // Predicated region
        $region13: #{tpu_custom_call.1} parent=11 // pred_check
          %p124 = pneg %p62
        $region14: #{tpu_custom_call.1} parent=11 // pred_check_branch
          %126 = sbr.rel (%p124) target = $region16
        $region15: #{tpu_custom_call.1} parent=11 // pred_region
          _
        $region16: #{tpu_custom_call.1} parent=11 // pred_fallthru
          _
        // Predicated region
        $region17: #{tpu_custom_call.1} parent=11 // pred_check
          %p127 = pneg %p83
        $region18: #{tpu_custom_call.1} parent=11 // pred_check_branch
          %129 = sbr.rel (%p127) target = $region20
        $region19: #{tpu_custom_call.1} parent=11 // pred_region
          _
        $region20: #{tpu_custom_call.1} parent=11 // pred_fallthru
          _
      $region12: #{tpu_custom_call.1} parent=5 // pred_fallthru
        _
      %p130 = scmp.lt.s32.totalorder %s15, 2
      // Predicated region
      $region21: #{tpu_custom_call.1} parent=5 // pred_check
        %p131 = pneg %p130
      $region22: #{tpu_custom_call.1} parent=5 // pred_check_branch
        %133 = sbr.rel (%p131) target = $region24
      $region23: #{tpu_custom_call.1} parent=5 // pred_region
        // Predicated region
        $region25: #{tpu_custom_call.1} parent=23 // pred_check
          %p134 = pneg %p35
        $region26: #{tpu_custom_call.1} parent=23 // pred_check_branch
          %136 = sbr.rel (%p134) target = $region28
        $region27: #{tpu_custom_call.1} parent=23 // pred_region
          %s137 = sand.u32 %s25, 1
          %s138 = scalar_lea.sflag [#allocation3], %s137
          %s139 = sand.u32 %s25, 1
          %s140 = smul.addr %s139, 256
          %s141 = scalar_lea.vmem [#allocation2], %s140
          %s142 = smul.u32 2, %s15
          %144 = vsyncadd %s138, 0
          %s145 = smul.addr %s142, 16
          %s146 = smul.addr %s145, 8
          %s147 = scalar_lea.hbm %s0, %s146
          %s148 = sshll.u32 %s147, 4
          %s149 = int_to_ptr.hbm [resolvable:$true] %s148
          %s150 = sshll.u32 %s141, 4
          %s151 = int_to_ptr.vmem [resolvable:$true] %s150
          %156 = dma.hbm_to_vmem [thread:$0]  %s149, 4096, %s151, %s138, 256, 256, 16
        $region28: #{tpu_custom_call.1} parent=23 // pred_fallthru
          _
      $region24: #{tpu_custom_call.1} parent=5 // pred_fallthru
        _
      %p157 = scmp.le.s32.totalorder 1, %s15
      %p158 = scmp.lt.s32.totalorder %s15, 3
      %p159 = pnand %p157, %p158
      %p160 = pneg %p159
      // Predicated region
      $region29: #{tpu_custom_call.1} parent=5 // pred_check
        _
      $region30: #{tpu_custom_call.1} parent=5 // pred_check_branch
        %162 = sbr.rel (%p159) target = $region32
      $region31: #{tpu_custom_call.1} parent=5 // pred_region
        %s163 = ssub.s32 %s15, 1
        %s164 = sand.u32 %s28, 1
        %s165 = scalar_lea.sflag [#allocation3], %s164
        %s166 = sand.u32 %s28, 1
        %s167 = smul.addr %s166, 256
        %s168 = scalar_lea.vmem [#allocation2], %s167
        // Predicated region
        $region33: #{tpu_custom_call.1} parent=31 // pred_check
          %p169 = pneg %p41
        $region34: #{tpu_custom_call.1} parent=31 // pred_check_branch
          %171 = sbr.rel (%p169) target = $region36
        $region35: #{tpu_custom_call.1} parent=31 // pred_region
          %173 = dma.done %s165, 4096
        $region36: #{tpu_custom_call.1} parent=31 // pred_fallthru
          _
        %s174 = sand.u32 %s28, 1
        %s175 = scalar_lea.sflag [#allocation3], %s174
        %s176 = sand.u32 %s28, 1
        %s177 = smul.addr %s176, 256
        %s178 = scalar_lea.vmem [#allocation2], %s177
        %p179 = pneg %p41
        %p180 = pneg %p38
        %p181 = pneg %p62
        %p182 = pneg %p59
        %p183 = pneg %p83
        %p184 = pneg %p80
        %p185 = pneg %p109
        %p186 = pneg %p106
        %s187 = sand.u32 %s96, 1
        %s188 = scalar_lea.sflag [#allocation4], %s187
        %s189 = sand.u32 %s96, 1
        %s190 = smul.addr %s189, 256
        %s191 = scalar_lea.vmem [#allocation5], %s190
        %s192 = smul.u32 2, %s20
        %s193 = smul.u32 2, %s20
        %v194 = vld [vmem:[%s168] sm:$0xff]
        %v195 = vld [vmem:[%s168 + $0x8] sm:$0xff]
        %v196 = vld [vmem:[%s168 + $0x10] sm:$0xff]
        %v197 = vld [vmem:[%s168 + $0x18] sm:$0xff]
        %v198 = vld [vmem:[%s168 + $0x20] sm:$0xff]
        %v199 = vld [vmem:[%s168 + $0x28] sm:$0xff]
        %v200 = vld [vmem:[%s168 + $0x30] sm:$0xff]
        %v201 = vld [vmem:[%s168 + $0x38] sm:$0xff]
        %v202 = vld [vmem:[%s168 + $0x40] sm:$0xff]
        %v203 = vld [vmem:[%s168 + $0x48] sm:$0xff]
        %v204 = vld [vmem:[%s168 + $0x50] sm:$0xff]
        %v205 = vld [vmem:[%s168 + $0x58] sm:$0xff]
        %v206 = vld [vmem:[%s168 + $0x60] sm:$0xff]
        %v207 = vld [vmem:[%s168 + $0x68] sm:$0xff]
        %v208 = vld [vmem:[%s168 + $0x70] sm:$0xff]
        %v209 = vld [vmem:[%s168 + $0x78] sm:$0xff]
        %v210 = vld [vmem:[%s168 + $0x80] sm:$0xff]
        %v211 = vld [vmem:[%s168 + $0x88] sm:$0xff]
        %v212 = vld [vmem:[%s168 + $0x90] sm:$0xff]
        %v213 = vld [vmem:[%s168 + $0x98] sm:$0xff]
        %v214 = vld [vmem:[%s168 + $0xa0] sm:$0xff]
        %v215 = vld [vmem:[%s168 + $0xa8] sm:$0xff]
        %v216 = vld [vmem:[%s168 + $0xb0] sm:$0xff]
        %v217 = vld [vmem:[%s168 + $0xb8] sm:$0xff]
        %v218 = vld [vmem:[%s168 + $0xc0] sm:$0xff]
        %v219 = vld [vmem:[%s168 + $0xc8] sm:$0xff]
        %v220 = vld [vmem:[%s168 + $0xd0] sm:$0xff]
        %v221 = vld [vmem:[%s168 + $0xd8] sm:$0xff]
        %v222 = vld [vmem:[%s168 + $0xe0] sm:$0xff]
        %v223 = vld [vmem:[%s168 + $0xe8] sm:$0xff]
        %v224 = vld [vmem:[%s168 + $0xf0] sm:$0xff]
        %v225 = vld [vmem:[%s168 + $0xf8] sm:$0xff]
        %v226 = vadd.f32 %v194, %v195
        %227 = vadd.xlane.f32.xlu0 %v226
        %v228 = vpop.xlane.xlu0 %227
        %v229 = vadd.f32 %v196, %v197
        %230 = vadd.xlane.f32.xlu0 %v229
        %v231 = vpop.xlane.xlu0 %230
        %v232 = vadd.f32 %v198, %v199
        %233 = vadd.xlane.f32.xlu0 %v232
        %v234 = vpop.xlane.xlu0 %233
        %v235 = vadd.f32 %v200, %v201
        %236 = vadd.xlane.f32.xlu0 %v235
        %v237 = vpop.xlane.xlu0 %236
        %v238 = vadd.f32 %v202, %v203
        %239 = vadd.xlane.f32.xlu0 %v238
        %v240 = vpop.xlane.xlu0 %239
        %v241 = vadd.f32 %v204, %v205
        %242 = vadd.xlane.f32.xlu0 %v241
        %v243 = vpop.xlane.xlu0 %242
        %v244 = vadd.f32 %v206, %v207
        %245 = vadd.xlane.f32.xlu0 %v244
        %v246 = vpop.xlane.xlu0 %245
        %v247 = vadd.f32 %v208, %v209
        %248 = vadd.xlane.f32.xlu0 %v247
        %v249 = vpop.xlane.xlu0 %248
        %v250 = vadd.f32 %v210, %v211
        %251 = vadd.xlane.f32.xlu0 %v250
        %v252 = vpop.xlane.xlu0 %251
        %v253 = vadd.f32 %v212, %v213
        %254 = vadd.xlane.f32.xlu0 %v253
        %v255 = vpop.xlane.xlu0 %254
        %v256 = vadd.f32 %v214, %v215
        %257 = vadd.xlane.f32.xlu0 %v256
        %v258 = vpop.xlane.xlu0 %257
        %v259 = vadd.f32 %v216, %v217
        %260 = vadd.xlane.f32.xlu0 %v259
        %v261 = vpop.xlane.xlu0 %260
        %v262 = vadd.f32 %v218, %v219
        %263 = vadd.xlane.f32.xlu0 %v262
        %v264 = vpop.xlane.xlu0 %263
        %v265 = vadd.f32 %v220, %v221
        %266 = vadd.xlane.f32.xlu0 %v265
        %v267 = vpop.xlane.xlu0 %266
        %v268 = vadd.f32 %v222, %v223
        %269 = vadd.xlane.f32.xlu0 %v268
        %v270 = vpop.xlane.xlu0 %269
        %v271 = vadd.f32 %v224, %v225
        %272 = vadd.xlane.f32.xlu0 %v271
        %v273 = vpop.xlane.xlu0 %272
        %v274 = vmul.f32 %v228, 0.00390625
        %v275 = vmul.f32 %v231, 0.00390625
        %v276 = vmul.f32 %v234, 0.00390625
        %v277 = vmul.f32 %v237, 0.00390625
        %v278 = vmul.f32 %v240, 0.00390625
        %v279 = vmul.f32 %v243, 0.00390625
        %v280 = vmul.f32 %v246, 0.00390625
        %v281 = vmul.f32 %v249, 0.00390625
        %v282 = vmul.f32 %v252, 0.00390625
        %v283 = vmul.f32 %v255, 0.00390625
        %v284 = vmul.f32 %v258, 0.00390625
        %v285 = vmul.f32 %v261, 0.00390625
        %v286 = vmul.f32 %v264, 0.00390625
        %v287 = vmul.f32 %v267, 0.00390625
        %v288 = vmul.f32 %v270, 0.00390625
        %v289 = vmul.f32 %v273, 0.00390625
        %v290 = vld [vmem:[%s1] sm:$0xff]
        %v291 = vld [vmem:[%s1 + $0x8] sm:$0xff]
        %v292 = vld [vmem:[%s1 + $0x10] sm:$0xff]
        %v293 = vld [vmem:[%s1 + $0x18] sm:$0xff]
        %v294 = vld [vmem:[%s1 + $0x20] sm:$0xff]
        %v295 = vld [vmem:[%s1 + $0x28] sm:$0xff]
        %v296 = vld [vmem:[%s1 + $0x30] sm:$0xff]
        %v297 = vld [vmem:[%s1 + $0x38] sm:$0xff]
        %v314 = vlaneseq
        %v315 = vand.u32 %v314, 127
        %v316 = vperm.slane %v274, %v315
        %v317 = vadd.s32 %v315, 4294967288
        %v318 = vperm.slane %v275, %v317
        %vm319 = vcmask 130112
        %v320 = vsel %vm319, %v318, %v316
        %v321 = vadd.s32 %v315, 4294967280
        %v322 = vperm.slane %v276, %v321
        %vm323 = vcmask 195712
        %v324 = vsel %vm323, %v322, %v320
        %v325 = vadd.s32 %v315, 4294967272
        %v326 = vperm.slane %v277, %v325
        %vm327 = vcmask 261312
        %v328 = vsel %vm327, %v326, %v324
        %v329 = vadd.s32 %v315, 4294967264
        %v330 = vperm.slane %v278, %v329
        %vm331 = vcmask 326912
        %v332 = vsel %vm331, %v330, %v328
        %v333 = vadd.s32 %v315, 4294967256
        %v334 = vperm.slane %v279, %v333
        %vm335 = vcmask 392512
        %v336 = vsel %vm335, %v334, %v332
        %v337 = vadd.s32 %v315, 4294967248
        %v338 = vperm.slane %v280, %v337
        %vm339 = vcmask 458112
        %v340 = vsel %vm339, %v338, %v336
        %v341 = vadd.s32 %v315, 4294967240
        %v342 = vperm.slane %v281, %v341
        %vm343 = vcmask 523712
        %v344 = vsel %vm343, %v342, %v340
        %v345 = vperm.slane %v282, %v315
        %v346 = vperm.slane %v283, %v317
        %v347 = vsel %vm319, %v346, %v345
        %v348 = vperm.slane %v284, %v321
        %v349 = vsel %vm323, %v348, %v347
        %v350 = vperm.slane %v285, %v325
        %v351 = vsel %vm327, %v350, %v349
        %v352 = vperm.slane %v286, %v329
        %v353 = vsel %vm331, %v352, %v351
        %v354 = vperm.slane %v287, %v333
        %v355 = vsel %vm335, %v354, %v353
        %v356 = vperm.slane %v288, %v337
        %v357 = vsel %vm339, %v356, %v355
        %v358 = vperm.slane %v289, %v341
        %v359 = vsel %vm343, %v358, %v357
        %vm360 = vcmask 1041409
        %v361 = vsel %vm360, %v359, %v344
        %vm362 = vcmask 523264
        %v363 = vsel %vm362, %v361, 0
        %365 = vmatpush.msra.mxu0 0.0
        %366 = vmatpush.msra.mxu0 0.0
        %367 = vmatpush.msra.mxu0 0.0
        %368 = vmatpush.msra.mxu0 0.0
        %369 = vmatpush.msra.mxu0 0.0
        %370 = vmatpush.msra.mxu0 0.0
        %371 = vmatpush.msra.mxu0 0.0
        %372 = vmatpush.msra.mxu0 0.0
        %373 = vmatpush.msra.mxu0 %v297
        %374 = vmatpush.msra.mxu0 %v296
        %375 = vmatpush.msra.mxu0 %v295
        %376 = vmatpush.msra.mxu0 %v294
        %377 = vmatpush.msra.mxu0 %v293
        %378 = vmatpush.msra.mxu0 %v292
        %379 = vmatpush.msra.mxu0 %v291
        %380 = vmatpush.msra.mxu0 %v290
        %381 = vmatmul.f32.gmra.mxu0 %v363
        %v382 = vpop.f32.mrf.mxu0
        %v383 = vadd.f32 0.0, %v382
        %384 = vdwg.mxu0
        %v385 = vmax.f32 %v383, 0.0
        %v386 = vld [vmem:[%s2] sm:$0xf]
        %vm387 = vcmask 31744
        %v389 = vsel %vm387, %v385, 0
        %vm391 = vcmask 1043456
        %v393 = vsel %vm391, %v386, 0
        %395 = vmatpush.msra.mxu0 0.0
        %396 = vmatpush.msra.mxu0 0.0
        %397 = vmatpush.msra.mxu0 0.0
        %398 = vmatpush.msra.mxu0 0.0
        %399 = vmatpush.msra.mxu0 0.0
        %400 = vmatpush.msra.mxu0 0.0
        %401 = vmatpush.msra.mxu0 0.0
        %402 = vmatpush.msra.mxu0 0.0
        %403 = vmatpush.msra.mxu0 0.0
        %404 = vmatpush.msra.mxu0 0.0
        %405 = vmatpush.msra.mxu0 0.0
        %406 = vmatpush.msra.mxu0 0.0
        %407 = vmatpush.msra.mxu0 0.0
        %408 = vmatpush.msra.mxu0 0.0
        %409 = vmatpush.msra.mxu0 0.0
        %410 = vmatpush.msra.mxu0 %v393
        %411 = vmatmul.f32.gmra.mxu0 %v389
        %v412 = vpop.f32.mrf.mxu0
        %v413 = vadd.f32 0.0, %v412
        %414 = vdwg.mxu0
        %v415 = vxor.u32 %v413, 2147483648
        %v416 = vmul.f32 %v415, 1.442695
        %v417 = vpow.pop %v416
        %v418 = vadd.f32 %v417, 1.0
        %v419 = vrcp.pop %v418
        %v420 = vmul.f32 %v418, %v419
        %v421 = vsub.f32 1.0, %v420
        %v422 = vmul.f32 %v419, %v421
        %v423 = vadd.f32 %v419, %v422
        %vm424 = vweird.f32 %v418
        %vm425 = vweird.f32 %v419
        %vm426 = vmor %vm424, %vm425
        %v427 = vsel %vm426, %v419, %v423
        %v428 = vand.u32 2147483647, %v418
        %vm429 = vcmp.eq.f32.partialorder %v428, 8.507059e+37
        %v430 = vand.u32 %v418, 2147483648
        %v431 = vor.u32 1.1754944e-38, %v430
        %v432 = vsel %vm429, %v431, %v427
        %v433 = vmul.f32 1.0, %v432
        %v434 = vperm.slane %v433, 0
        %v435 = vlaneseq
        %v436 = vshrl.u32 %v435, 7
        %438 = vset.pattern.permute.xlu0 %v436
        %439 = vperm.xlu0 %438, %v434
        %v440 = vpop.permute.xlu0 %439
        %v441 = vlaneseq
        %v442 = vshrl.u32 %v441, 7
        %v443 = vadd.s32 %v442, 8
        %444 = vset.pattern.permute.xlu0 %v443
        %445 = vperm.xlu0 %444, %v434
        %v446 = vpop.permute.xlu0 %445
        %v447 = vlaneseq
        %v448 = vshrl.u32 %v447, 7
        %v449 = vadd.s32 %v448, 16
        %450 = vset.pattern.permute.xlu0 %v449
        %451 = vperm.xlu0 %450, %v434
        %v452 = vpop.permute.xlu0 %451
        %v453 = vlaneseq
        %v454 = vshrl.u32 %v453, 7
        %v455 = vadd.s32 %v454, 24
        %456 = vset.pattern.permute.xlu0 %v455
        %457 = vperm.xlu0 %456, %v434
        %v458 = vpop.permute.xlu0 %457
        %v459 = vlaneseq
        %v460 = vshrl.u32 %v459, 7
        %v461 = vadd.s32 %v460, 32
        %462 = vset.pattern.permute.xlu0 %v461
        %463 = vperm.xlu0 %462, %v434
        %v464 = vpop.permute.xlu0 %463
        %v465 = vlaneseq
        %v466 = vshrl.u32 %v465, 7
        %v467 = vadd.s32 %v466, 40
        %468 = vset.pattern.permute.xlu0 %v467
        %469 = vperm.xlu0 %468, %v434
        %v470 = vpop.permute.xlu0 %469
        %v471 = vlaneseq
        %v472 = vshrl.u32 %v471, 7
        %v473 = vadd.s32 %v472, 48
        %474 = vset.pattern.permute.xlu0 %v473
        %475 = vperm.xlu0 %474, %v434
        %v476 = vpop.permute.xlu0 %475
        %v477 = vlaneseq
        %v478 = vshrl.u32 %v477, 7
        %v479 = vadd.s32 %v478, 56
        %480 = vset.pattern.permute.xlu0 %v479
        %481 = vperm.xlu0 %480, %v434
        %v482 = vpop.permute.xlu0 %481
        %v483 = vperm.slane %v433, 1
        %v484 = vlaneseq
        %v485 = vshrl.u32 %v484, 7
        %487 = vset.pattern.permute.xlu0 %v485
        %488 = vperm.xlu0 %487, %v483
        %v489 = vpop.permute.xlu0 %488
        %v490 = vlaneseq
        %v491 = vshrl.u32 %v490, 7
        %v492 = vadd.s32 %v491, 8
        %493 = vset.pattern.permute.xlu0 %v492
        %494 = vperm.xlu0 %493, %v483
        %v495 = vpop.permute.xlu0 %494
        %v496 = vlaneseq
        %v497 = vshrl.u32 %v496, 7
        %v498 = vadd.s32 %v497, 16
        %499 = vset.pattern.permute.xlu0 %v498
        %500 = vperm.xlu0 %499, %v483
        %v501 = vpop.permute.xlu0 %500
        %v502 = vlaneseq
        %v503 = vshrl.u32 %v502, 7
        %v504 = vadd.s32 %v503, 24
        %505 = vset.pattern.permute.xlu0 %v504
        %506 = vperm.xlu0 %505, %v483
        %v507 = vpop.permute.xlu0 %506
        %v508 = vlaneseq
        %v509 = vshrl.u32 %v508, 7
        %v510 = vadd.s32 %v509, 32
        %511 = vset.pattern.permute.xlu0 %v510
        %512 = vperm.xlu0 %511, %v483
        %v513 = vpop.permute.xlu0 %512
        %v514 = vlaneseq
        %v515 = vshrl.u32 %v514, 7
        %v516 = vadd.s32 %v515, 40
        %517 = vset.pattern.permute.xlu0 %v516
        %518 = vperm.xlu0 %517, %v483
        %v519 = vpop.permute.xlu0 %518
        %v520 = vlaneseq
        %v521 = vshrl.u32 %v520, 7
        %v522 = vadd.s32 %v521, 48
        %523 = vset.pattern.permute.xlu0 %v522
        %524 = vperm.xlu0 %523, %v483
        %v525 = vpop.permute.xlu0 %524
        %v526 = vlaneseq
        %v527 = vshrl.u32 %v526, 7
        %v528 = vadd.s32 %v527, 56
        %529 = vset.pattern.permute.xlu0 %v528
        %530 = vperm.xlu0 %529, %v483
        %v531 = vpop.permute.xlu0 %530
        %v532 = vmul.f32 %v194, %v440
        %v533 = vmul.f32 %v195, %v440
        %v534 = vmul.f32 %v196, %v446
        %v535 = vmul.f32 %v197, %v446
        %v536 = vmul.f32 %v198, %v452
        %v537 = vmul.f32 %v199, %v452
        %v538 = vmul.f32 %v200, %v458
        %v539 = vmul.f32 %v201, %v458
        %v540 = vmul.f32 %v202, %v464
        %v541 = vmul.f32 %v203, %v464
        %v542 = vmul.f32 %v204, %v470
        %v543 = vmul.f32 %v205, %v470
        %v544 = vmul.f32 %v206, %v476
        %v545 = vmul.f32 %v207, %v476
        %v546 = vmul.f32 %v208, %v482
        %v547 = vmul.f32 %v209, %v482
        %v548 = vmul.f32 %v210, %v489
        %v549 = vmul.f32 %v211, %v489
        %v550 = vmul.f32 %v212, %v495
        %v551 = vmul.f32 %v213, %v495
        %v552 = vmul.f32 %v214, %v501
        %v553 = vmul.f32 %v215, %v501
        %v554 = vmul.f32 %v216, %v507
        %v555 = vmul.f32 %v217, %v507
        %v556 = vmul.f32 %v218, %v513
        %v557 = vmul.f32 %v219, %v513
        %v558 = vmul.f32 %v220, %v519
        %v559 = vmul.f32 %v221, %v519
        %v560 = vmul.f32 %v222, %v525
        %v561 = vmul.f32 %v223, %v525
        %v562 = vmul.f32 %v224, %v531
        %v563 = vmul.f32 %v225, %v531
        %564 = vst [vmem:[%s191] sm:$0xff] %v532
        %565 = vst [vmem:[%s191 + $0x8] sm:$0xff] %v533
        %566 = vst [vmem:[%s191 + $0x10] sm:$0xff] %v534
        %567 = vst [vmem:[%s191 + $0x18] sm:$0xff] %v535
        %568 = vst [vmem:[%s191 + $0x20] sm:$0xff] %v536
        %569 = vst [vmem:[%s191 + $0x28] sm:$0xff] %v537
        %570 = vst [vmem:[%s191 + $0x30] sm:$0xff] %v538
        %571 = vst [vmem:[%s191 + $0x38] sm:$0xff] %v539
        %572 = vst [vmem:[%s191 + $0x40] sm:$0xff] %v540
        %573 = vst [vmem:[%s191 + $0x48] sm:$0xff] %v541
        %574 = vst [vmem:[%s191 + $0x50] sm:$0xff] %v542
        %575 = vst [vmem:[%s191 + $0x58] sm:$0xff] %v543
        %576 = vst [vmem:[%s191 + $0x60] sm:$0xff] %v544
        %577 = vst [vmem:[%s191 + $0x68] sm:$0xff] %v545
        %578 = vst [vmem:[%s191 + $0x70] sm:$0xff] %v546
        %579 = vst [vmem:[%s191 + $0x78] sm:$0xff] %v547
        %580 = vst [vmem:[%s191 + $0x80] sm:$0xff] %v548
        %581 = vst [vmem:[%s191 + $0x88] sm:$0xff] %v549
        %582 = vst [vmem:[%s191 + $0x90] sm:$0xff] %v550
        %583 = vst [vmem:[%s191 + $0x98] sm:$0xff] %v551
        %584 = vst [vmem:[%s191 + $0xa0] sm:$0xff] %v552
        %585 = vst [vmem:[%s191 + $0xa8] sm:$0xff] %v553
        %586 = vst [vmem:[%s191 + $0xb0] sm:$0xff] %v554
        %587 = vst [vmem:[%s191 + $0xb8] sm:$0xff] %v555
        %588 = vst [vmem:[%s191 + $0xc0] sm:$0xff] %v556
        %589 = vst [vmem:[%s191 + $0xc8] sm:$0xff] %v557
        %590 = vst [vmem:[%s191 + $0xd0] sm:$0xff] %v558
        %591 = vst [vmem:[%s191 + $0xd8] sm:$0xff] %v559
        %592 = vst [vmem:[%s191 + $0xe0] sm:$0xff] %v560
        %593 = vst [vmem:[%s191 + $0xe8] sm:$0xff] %v561
        %594 = vst [vmem:[%s191 + $0xf0] sm:$0xff] %v562
        %595 = vst [vmem:[%s191 + $0xf8] sm:$0xff] %v563
        %s596 = sand.u32 %s96, 1
        %s597 = scalar_lea.sflag [#allocation4], %s596
        %s598 = sand.u32 %s96, 1
        %s599 = smul.addr %s598, 256
        %s600 = scalar_lea.vmem [#allocation5], %s599
        // Predicated region
        $region37: #{tpu_custom_call.1} parent=31 // pred_check
          %p601 = pneg %p106
        $region38: #{tpu_custom_call.1} parent=31 // pred_check_branch
          %603 = sbr.rel (%p601) target = $region40
        $region39: #{tpu_custom_call.1} parent=31 // pred_region
          %s604 = smul.u32 2, %s20
          %606 = vsyncadd %s597, 0
          %s607 = smul.addr %s604, 16
          %s608 = smul.addr %s607, 8
          %s609 = scalar_lea.hbm %s3, %s608
          %s610 = sshll.u32 %s600, 4
          %s611 = int_to_ptr.vmem [resolvable:$true] %s610
          %s612 = sshll.u32 %s609, 4
          %s613 = int_to_ptr.hbm [resolvable:$true] %s612
          %618 = dma.vmem_to_hbm [thread:$0]  %s611, 4096, %s613, %s597, 256, 256, 16
        $region40: #{tpu_custom_call.1} parent=31 // pred_fallthru
          _
      $region32: #{tpu_custom_call.1} parent=5 // pred_fallthru
        _
      %p619 = scmp.le.s32.totalorder 2, %s15
      // Predicated region
      $region41: #{tpu_custom_call.1} parent=5 // pred_check
        %p620 = pneg %p619
      $region42: #{tpu_custom_call.1} parent=5 // pred_check_branch
        %622 = sbr.rel (%p620) target = $region44
      $region43: #{tpu_custom_call.1} parent=5 // pred_region
        %s623 = ssub.s32 %s15, 2
        // Predicated region
        $region45: #{tpu_custom_call.1} parent=43 // pred_check
          %p624 = pneg %p112
        $region46: #{tpu_custom_call.1} parent=43 // pred_check_branch
          %626 = sbr.rel (%p624) target = $region48
        $region47: #{tpu_custom_call.1} parent=43 // pred_region
          %s627 = sand.u32 %s97, 1
          %s628 = scalar_lea.sflag [#allocation4], %s627
          %s629 = sand.u32 %s97, 1
          %s630 = smul.addr %s629, 256
          %s631 = scalar_lea.vmem [#allocation5], %s630
          %633 = dma.done %s628, 4096
        $region48: #{tpu_custom_call.1} parent=43 // pred_fallthru
          _
      $region44: #{tpu_custom_call.1} parent=5 // pred_fallthru
        _
    $region6: #{tpu_custom_call.1} parent=1 // loop_footer
      %s19 = sadd.s32 1, %s15
    $region7: #{tpu_custom_call.1} parent=1 // loop_footer_branch
      %14 = sbr.rel target = $region3
    $region8: #{tpu_custom_call.1} parent=1 // loop_exit
      _
    %634 = vsyncpa [#allocation3], 1
    %s635 = scalar_lea.sflag [#allocation3], 1
    %636 = vsyncpa %s635, 1
    %637 = vsyncpa [#allocation4], 1
    %s638 = scalar_lea.sflag [#allocation4], 1
    %639 = vsyncpa %s638, 1

</llo_original>
